<compile_context>
chip_gen: v7x
topology: tpu7x:2x2x1
jax: 0.10.0
libtpu: 0.0.40
codegen_flags: <defaults>
</compile_context>

<pallas_src>
import functools

import jax
import jax.numpy as jnp
from jax import lax
from jax.experimental import pallas as pl
from jax.experimental.pallas import tpu as pltpu

_SUBLANE = 8     # f32 sublane tile
_LANE = 128      # lane tile


def _round_up(x, m):
    return ((x + m - 1) // m) * m


# ----------------------------- fused Pallas kernel -------------------------

def _fused_forward_kernel(img_ref, txt_ref, w_img_ref, w_txt_ref,
                          w1i_ref, w1t_ref, b1_ref, g_ref, beta_ref,
                          w2_ref, b2_ref, o_ref):
    """Whole forward pass in one VMEM-resident, grid-less kernel.

      image proj (bf16 MXU, f32 acc) --+
                                       +-- ConcatFusion fused into split-W1:
      text  proj (bf16 MXU, f32 acc) --+   h = img_f@W1[:D] + txt_f@W1[D:] + b1
          -> LayerNorm -> GELU(tanh) -> Dropout(eval id) -> Linear (lane-padded)
    """
    # --- encoder projections: bf16 operands, f32 accumulation on the MXU ---
    img_f = jnp.dot(img_ref[...], w_img_ref[...],
                    preferred_element_type=jnp.float32)
    txt_f = jnp.dot(txt_ref[...], w_txt_ref[...],
                    preferred_element_type=jnp.float32)

    # --- ConcatFusion + classifier Linear, fused algebraically ---
    # torch.cat([img_f, txt_f], dim=1) @ W1  ==  img_f @ W1[:D] + txt_f @ W1[D:]
    # (no scratch buffer, no masked lane-slice stores, no VMEM round-trip).
    h = (jnp.dot(img_f.astype(jnp.bfloat16), w1i_ref[...],
                 preferred_element_type=jnp.float32)
         + jnp.dot(txt_f.astype(jnp.bfloat16), w1t_ref[...],
                   preferred_element_type=jnp.float32)
         + b1_ref[...])

    # LayerNorm(HID), eps = 1e-5 (PyTorch default), affine; f32 VPU math.
    mu = jnp.mean(h, axis=-1, keepdims=True)
    var = jnp.mean((h - mu) * (h - mu), axis=-1, keepdims=True)
    hn = (h - mu) * lax.rsqrt(var + 1e-5)
    hn = hn * g_ref[...] + beta_ref[...]

    # GELU (tanh approximation -> EUP slot; tiny deviation from exact erf
    # nn.GELU(), acceptable per review).
    ge = jax.nn.gelu(hn, approximate=True)

    # Dropout(0.5): identity in eval mode.
    # TODO(synk): training-mode dropout (pltpu.prng_random_bits mask) not emitted.

    # Linear(HID -> num_classes), columns lane-padded to 128 -> unmasked vst.
    o_ref[...] = jnp.dot(ge.astype(jnp.bfloat16), w2_ref[...],
                         preferred_element_type=jnp.float32) + b2_ref[...]


# --------------------------- one-time parameter prep -----------------------

def prepare_params(params, batch_pad=_SUBLANE):
    """Hoist ALL padding / casting / broadcasting out of the per-call path."""
    D = params["w_img"].shape[1]
    HID = params["w1"].shape[1]
    NC = params["w2"].shape[1]
    NCp = _round_up(NC, _LANE)
    Bp = batch_pad

    w2_p = jnp.pad(params["w2"], ((0, 0), (0, NCp - NC)))
    b2_p = jnp.pad(params["b2"], ((0, 0), (0, NCp - NC)))

    return {
        # encoder stand-ins
        "embed": params["embed"].astype(jnp.float32),          # gather table (XLA)
        "w_img": params["w_img"].astype(jnp.bfloat16),          # [Kimg, D]
        "w_txt": params["w_txt"].astype(jnp.bfloat16),          # [D, D]
        # classifier, W1 pre-split for the fused concat
        "w1_img": params["w1"][:D].astype(jnp.bfloat16),         # [D, HID]
        "w1_txt": params["w1"][D:].astype(jnp.bfloat16),         # [D, HID]
        "b1": jnp.broadcast_to(params["b1"], (Bp, HID)).astype(jnp.float32),
        "gamma": jnp.broadcast_to(params["gamma"], (Bp, HID)).astype(jnp.float32),
        "beta": jnp.broadcast_to(params["beta"], (Bp, HID)).astype(jnp.float32),
        "w2": w2_p.astype(jnp.bfloat16),                          # [HID, NCp]
        "b2": jnp.broadcast_to(b2_p, (Bp, NCp)).astype(jnp.float32),
    }


# ------------------------------ model wrapper ------------------------------

@functools.partial(jax.jit, static_argnames=("num_classes",))
def sentiment_clip_forward(image, text, prepped, *, num_classes):
    """Forward pass of SentimentCLIP(fusion='concat', ablation_mode='none')."""
    B = image.shape[0]
    Bp = _round_up(B, _SUBLANE)                  # sublane-dense batch (8)
    NCp = prepped["w2"].shape[1]                 # lane-dense output (128)

    # --- "encode_image": flatten NCHW, pad batch, cast to bf16 ---
    # TODO(synk): real pretrained CLIP ViT image encoder replaced by a
    # deterministic linear stand-in.
    img_flat = image.reshape(B, -1).astype(jnp.float32)
    img_flat = jnp.pad(img_flat, ((0, Bp - B), (0, 0))).astype(jnp.bfloat16)

    # --- "encode_text": embedding lookup + mean pool (XLA gather glue) ---
    # TODO(synk): real pretrained CLIP text transformer replaced by a
    # deterministic embedding/mean-pool/linear stand-in.
    txt_emb = jnp.mean(prepped["embed"][text], axis=1)        # [B, D] f32
    txt_emb = jnp.pad(txt_emb, ((0, Bp - B), (0, 0))).astype(jnp.bfloat16)

    vmem_spec = pl.BlockSpec(memory_space=pltpu.MemorySpace.VMEM)

    out_padded = pl.pallas_call(
        _fused_forward_kernel,
        out_shape=jax.ShapeDtypeStruct((Bp, NCp), jnp.float32),
        in_specs=[vmem_spec] * 11,
        out_specs=vmem_spec,
    )(img_flat, txt_emb,
      prepped["w_img"], prepped["w_txt"],
      prepped["w1_img"], prepped["w1_txt"],
      prepped["b1"], prepped["gamma"], prepped["beta"],
      prepped["w2"], prepped["b2"])

    # Slice the padded sublanes/lanes back to the logical [B, num_classes].
    return out_padded[:B, :num_classes]


# ---------------------------------- main -----------------------------------

if __name__ == "__main__":
    key = jax.random.PRNGKey(0)
    ks = jax.random.split(key, 12)

    # Small shapes consistent with the forward pass.
    B, C, H, W = 2, 4, 16, 16          # image: NCHW
    T, VOCAB = 8, 64                   # text: token ids
    D = 32                             # feature_dim stand-in for CLIP's 512
    HID, NUM_CLASSES = 256, 3

    image = jax.random.normal(ks[0], (B, C, H, W), jnp.float32)
    text = jax.random.randint(ks[1], (B, T), 0, VOCAB, dtype=jnp.int32)

    params = {
        # encoder stand-ins
        "w_img": jax.random.normal(ks[2], (C * H * W, D), jnp.float32) * 0.02,
        "embed": jax.random.normal(ks[3], (VOCAB, D), jnp.float32) * 0.02,
        "w_txt": jax.random.normal(ks[4], (D, D), jnp.float32) * 0.1,
        # classifier: Linear(2D, 256) -> LayerNorm(256) -> GELU -> Dropout -> Linear(256, 3)
        "w1": jax.random.normal(ks[5], (2 * D, HID), jnp.float32) * 0.05,
        "b1": jax.random.normal(ks[6], (1, HID), jnp.float32) * 0.01,
        "gamma": jnp.ones((1, HID), jnp.float32),       # LayerNorm default init
        "beta": jnp.zeros((1, HID), jnp.float32),
        "w2": jax.random.normal(ks[7], (HID, NUM_CLASSES), jnp.float32) * 0.05,
        "b2": jax.random.normal(ks[8], (1, NUM_CLASSES), jnp.float32) * 0.01,
    }

    # One-time parameter preparation (padding / bf16 casts / bias broadcast)
    # kept OFF the per-call path.
    prepped = jax.tree_util.tree_map(jax.device_put, prepare_params(params))

    logits = sentiment_clip_forward(image, text, prepped,
                                    num_classes=NUM_CLASSES)
    jax.block_until_ready(logits)
    assert logits.shape == (B, NUM_CLASSES)
    assert logits.dtype == jnp.float32
    print("KERNEL_OK")
</pallas_src>

<mosaic_0001>
module attributes {stable_mosaic.version = 11 : i64} {
  func.func @_fused_forward_kernel(%arg0: memref<8x1024xbf16, #tpu.memory_space<vmem>>, %arg1: memref<8x32xbf16, #tpu.memory_space<vmem>>, %arg2: memref<1024x32xbf16, #tpu.memory_space<vmem>>, %arg3: memref<32x32xbf16, #tpu.memory_space<vmem>>, %arg4: memref<32x256xbf16, #tpu.memory_space<vmem>>, %arg5: memref<32x256xbf16, #tpu.memory_space<vmem>>, %arg6: memref<8x256xf32, #tpu.memory_space<vmem>>, %arg7: memref<8x256xf32, #tpu.memory_space<vmem>>, %arg8: memref<8x256xf32, #tpu.memory_space<vmem>>, %arg9: memref<256x128xbf16, #tpu.memory_space<vmem>>, %arg10: memref<8x128xf32, #tpu.memory_space<vmem>>, %arg11: memref<8x128xf32, #tpu.memory_space<vmem>>) attributes {dimension_semantics = [], scalar_prefetch = 0 : i64, scratch_operands = 0 : i64, tpu.core_type = #tpu.core_type<tc>} {
    %c0 = arith.constant 0 : index
    %c0_0 = arith.constant 0 : index
    %0 = vector.load %arg0[%c0, %c0_0] : memref<8x1024xbf16, #tpu.memory_space<vmem>>, vector<8x1024xbf16>
    %c0_1 = arith.constant 0 : index
    %c0_2 = arith.constant 0 : index
    %1 = vector.load %arg2[%c0_1, %c0_2] : memref<1024x32xbf16, #tpu.memory_space<vmem>>, vector<1024x32xbf16>
    %cst = arith.constant dense<0.000000e+00> : vector<8x32xf32>
    %2 = tpu.matmul %0, %1, %cst {dimension_numbers = #tpu.dot_dimension_numbers<[1], [0], [0], [1], [0, 0, 1, 1], [], []>} : vector<8x1024xbf16>, vector<1024x32xbf16>, vector<8x32xf32> -> vector<8x32xf32>
    %c0_3 = arith.constant 0 : index
    %c0_4 = arith.constant 0 : index
    %3 = vector.load %arg1[%c0_3, %c0_4] : memref<8x32xbf16, #tpu.memory_space<vmem>>, vector<8x32xbf16>
    %c0_5 = arith.constant 0 : index
    %c0_6 = arith.constant 0 : index
    %4 = vector.load %arg3[%c0_5, %c0_6] : memref<32x32xbf16, #tpu.memory_space<vmem>>, vector<32x32xbf16>
    %cst_7 = arith.constant dense<0.000000e+00> : vector<8x32xf32>
    %5 = tpu.matmul %3, %4, %cst_7 {dimension_numbers = #tpu.dot_dimension_numbers<[1], [0], [0], [1], [0, 0, 1, 1], [], []>} : vector<8x32xbf16>, vector<32x32xbf16>, vector<8x32xf32> -> vector<8x32xf32>
    %6 = arith.truncf %2 : vector<8x32xf32> to vector<8x32xbf16>
    %c0_8 = arith.constant 0 : index
    %c0_9 = arith.constant 0 : index
    %7 = vector.load %arg4[%c0_8, %c0_9] : memref<32x256xbf16, #tpu.memory_space<vmem>>, vector<32x256xbf16>
    %cst_10 = arith.constant dense<0.000000e+00> : vector<8x256xf32>
    %8 = tpu.matmul %6, %7, %cst_10 {dimension_numbers = #tpu.dot_dimension_numbers<[1], [0], [0], [1], [0, 0, 1, 1], [], []>} : vector<8x32xbf16>, vector<32x256xbf16>, vector<8x256xf32> -> vector<8x256xf32>
    %9 = arith.truncf %5 : vector<8x32xf32> to vector<8x32xbf16>
    %c0_11 = arith.constant 0 : index
    %c0_12 = arith.constant 0 : index
    %10 = vector.load %arg5[%c0_11, %c0_12] : memref<32x256xbf16, #tpu.memory_space<vmem>>, vector<32x256xbf16>
    %cst_13 = arith.constant dense<0.000000e+00> : vector<8x256xf32>
    %11 = tpu.matmul %9, %10, %cst_13 {dimension_numbers = #tpu.dot_dimension_numbers<[1], [0], [0], [1], [0, 0, 1, 1], [], []>} : vector<8x32xbf16>, vector<32x256xbf16>, vector<8x256xf32> -> vector<8x256xf32>
    %12 = arith.addf %8, %11 : vector<8x256xf32>
    %c0_14 = arith.constant 0 : index
    %c0_15 = arith.constant 0 : index
    %13 = vector.load %arg6[%c0_14, %c0_15] : memref<8x256xf32, #tpu.memory_space<vmem>>, vector<8x256xf32>
    %14 = arith.addf %12, %13 : vector<8x256xf32>
    %cst_16 = arith.constant dense<0.000000e+00> : vector<8xf32>
    %15 = vector.multi_reduction <add>, %14, %cst_16 [1] : vector<8x256xf32> to vector<8xf32>
    %16 = vector.shape_cast %15 : vector<8xf32> to vector<8x1xf32>
    %cst_17 = arith.constant 2.560000e+02 : f32
    %17 = vector.broadcast %cst_17 : f32 to vector<8x1xf32>
    %18 = arith.divf %16, %17 : vector<8x1xf32>
    %19 = vector.broadcast %18 : vector<8x1xf32> to vector<8x256xf32>
    %20 = arith.subf %14, %19 : vector<8x256xf32>
    %21 = vector.broadcast %18 : vector<8x1xf32> to vector<8x256xf32>
    %22 = arith.subf %14, %21 : vector<8x256xf32>
    %23 = arith.mulf %20, %22 : vector<8x256xf32>
    %cst_18 = arith.constant dense<0.000000e+00> : vector<8xf32>
    %24 = vector.multi_reduction <add>, %23, %cst_18 [1] : vector<8x256xf32> to vector<8xf32>
    %25 = vector.shape_cast %24 : vector<8xf32> to vector<8x1xf32>
    %cst_19 = arith.constant 2.560000e+02 : f32
    %26 = vector.broadcast %cst_19 : f32 to vector<8x1xf32>
    %27 = arith.divf %25, %26 : vector<8x1xf32>
    %28 = vector.broadcast %18 : vector<8x1xf32> to vector<8x256xf32>
    %29 = arith.subf %14, %28 : vector<8x256xf32>
    %cst_20 = arith.constant 9.99999974E-6 : f32
    %30 = vector.broadcast %cst_20 : f32 to vector<8x1xf32>
    %31 = arith.addf %27, %30 : vector<8x1xf32>
    %32 = math.rsqrt %31 : vector<8x1xf32>
    %33 = vector.broadcast %32 : vector<8x1xf32> to vector<8x256xf32>
    %34 = arith.mulf %29, %33 : vector<8x256xf32>
    %c0_21 = arith.constant 0 : index
    %c0_22 = arith.constant 0 : index
    %35 = vector.load %arg7[%c0_21, %c0_22] : memref<8x256xf32, #tpu.memory_space<vmem>>, vector<8x256xf32>
    %36 = arith.mulf %34, %35 : vector<8x256xf32>
    %c0_23 = arith.constant 0 : index
    %c0_24 = arith.constant 0 : index
    %37 = vector.load %arg8[%c0_23, %c0_24] : memref<8x256xf32, #tpu.memory_space<vmem>>, vector<8x256xf32>
    %38 = arith.addf %36, %37 : vector<8x256xf32>
    %39 = arith.mulf %38, %38 : vector<8x256xf32>
    %40 = arith.mulf %38, %39 : vector<8x256xf32>
    %cst_25 = arith.constant 4.471500e-02 : f32
    %41 = vector.broadcast %cst_25 : f32 to vector<8x256xf32>
    %42 = arith.mulf %41, %40 : vector<8x256xf32>
    %43 = arith.addf %38, %42 : vector<8x256xf32>
    %cst_26 = arith.constant 0.797884583 : f32
    %44 = vector.broadcast %cst_26 : f32 to vector<8x256xf32>
    %45 = arith.mulf %44, %43 : vector<8x256xf32>
    %46 = math.tanh %45 : vector<8x256xf32>
    %cst_27 = arith.constant 1.000000e+00 : f32
    %47 = vector.broadcast %cst_27 : f32 to vector<8x256xf32>
    %48 = arith.addf %47, %46 : vector<8x256xf32>
    %cst_28 = arith.constant 5.000000e-01 : f32
    %49 = vector.broadcast %cst_28 : f32 to vector<8x256xf32>
    %50 = arith.mulf %49, %48 : vector<8x256xf32>
    %51 = arith.mulf %38, %50 : vector<8x256xf32>
    %52 = arith.truncf %51 : vector<8x256xf32> to vector<8x256xbf16>
    %c0_29 = arith.constant 0 : index
    %c0_30 = arith.constant 0 : index
    %53 = vector.load %arg9[%c0_29, %c0_30] : memref<256x128xbf16, #tpu.memory_space<vmem>>, vector<256x128xbf16>
    %cst_31 = arith.constant dense<0.000000e+00> : vector<8x128xf32>
    %54 = tpu.matmul %52, %53, %cst_31 {dimension_numbers = #tpu.dot_dimension_numbers<[1], [0], [0], [1], [0, 0, 1, 1], [], []>} : vector<8x256xbf16>, vector<256x128xbf16>, vector<8x128xf32> -> vector<8x128xf32>
    %c0_32 = arith.constant 0 : index
    %c0_33 = arith.constant 0 : index
    %55 = vector.load %arg10[%c0_32, %c0_33] : memref<8x128xf32, #tpu.memory_space<vmem>>, vector<8x128xf32>
    %56 = arith.addf %54, %55 : vector<8x128xf32>
    %c0_34 = arith.constant 0 : index
    %c0_35 = arith.constant 0 : index
    %57 = vector.load %arg11[%c0_34, %c0_35] : memref<8x128xf32, #tpu.memory_space<vmem>>, vector<8x128xf32>
    tpu.vector_store %arg11[%c0_34, %c0_35], %56 {strides = array<i32>} : memref<8x128xf32, #tpu.memory_space<vmem>>, vector<8x128xf32>,
    return
  }
}

</mosaic_0001>

<llo_original>
// kernel: sentiment_clip_forward.1
$region0: #{sentiment_clip_forward.1}
  #allocation0 [shape = 'u32[]', space=smem, size = 0x4, offset = 0x4, fixed_abs, tag = 'smem constant byte address 0x4 - core index']
  #allocation1 [shape = 'u32[144,128]{1,0:T(1,128)}', space=vmem, size = 0x12000, scoped, tag = 'internal scratch']
  %s0 = inlined_call_operand.vmem [shape: bf16[8,1024], index: 0, kind: input, shape index: {}]
  %s1 = inlined_call_operand.vmem [shape: bf16[8,32], index: 1, kind: input, shape index: {}]
  %s2 = inlined_call_operand.vmem [shape: bf16[1024,32], index: 2, kind: input, shape index: {}]
  %s3 = inlined_call_operand.vmem [shape: bf16[32,32], index: 3, kind: input, shape index: {}]
  %s4 = inlined_call_operand.vmem [shape: bf16[32,256], index: 4, kind: input, shape index: {}]
  %s5 = inlined_call_operand.vmem [shape: bf16[32,256], index: 5, kind: input, shape index: {}]
  %s6 = inlined_call_operand.vmem [shape: f32[8,256], index: 6, kind: input, shape index: {}]
  %s7 = inlined_call_operand.vmem [shape: f32[8,256], index: 7, kind: input, shape index: {}]
  %s8 = inlined_call_operand.vmem [shape: f32[8,256], index: 8, kind: input, shape index: {}]
  %s9 = inlined_call_operand.vmem [shape: bf16[256,128], index: 9, kind: input, shape index: {}]
  %s10 = inlined_call_operand.vmem [shape: f32[8,128], index: 10, kind: input, shape index: {}]
  %s11 = inlined_call_operand.vmem [shape: f32[8,128], index: 11, kind: output, shape index: {}]
  %s12 = sld [smem:[#allocation0]]
  $region54: #{sentiment_clip_forward.1} parent=0
    _
  %s14 = ssub.s32 1, %s12
  %s15 = scalar_select 0, %s14, %s12
  // Predicated region
  $region2: #{sentiment_clip_forward.1} parent=0 // pred_check
    _
  $region3: #{sentiment_clip_forward.1} parent=0 // pred_check_branch
    %17 = sbr.rel (0) target = $region5
  $region4: #{sentiment_clip_forward.1} parent=0 // pred_region
    _
  $region5: #{sentiment_clip_forward.1} parent=0 // pred_fallthru
    _
  // Predicated region
  $region6: #{sentiment_clip_forward.1} parent=0 // pred_check
    _
  $region7: #{sentiment_clip_forward.1} parent=0 // pred_check_branch
    %19 = sbr.rel (0) target = $region9
  $region8: #{sentiment_clip_forward.1} parent=0 // pred_region
    _
  $region9: #{sentiment_clip_forward.1} parent=0 // pred_fallthru
    _
  // Predicated region
  $region10: #{sentiment_clip_forward.1} parent=0 // pred_check
    _
  $region11: #{sentiment_clip_forward.1} parent=0 // pred_check_branch
    %21 = sbr.rel (0) target = $region13
  $region12: #{sentiment_clip_forward.1} parent=0 // pred_region
    _
  $region13: #{sentiment_clip_forward.1} parent=0 // pred_fallthru
    _
  // Predicated region
  $region14: #{sentiment_clip_forward.1} parent=0 // pred_check
    _
  $region15: #{sentiment_clip_forward.1} parent=0 // pred_check_branch
    %23 = sbr.rel (0) target = $region17
  $region16: #{sentiment_clip_forward.1} parent=0 // pred_region
    _
  $region17: #{sentiment_clip_forward.1} parent=0 // pred_fallthru
    _
  // Predicated region
  $region18: #{sentiment_clip_forward.1} parent=0 // pred_check
    _
  $region19: #{sentiment_clip_forward.1} parent=0 // pred_check_branch
    %25 = sbr.rel (0) target = $region21
  $region20: #{sentiment_clip_forward.1} parent=0 // pred_region
    _
  $region21: #{sentiment_clip_forward.1} parent=0 // pred_fallthru
    _
  // Predicated region
  $region22: #{sentiment_clip_forward.1} parent=0 // pred_check
    _
  $region23: #{sentiment_clip_forward.1} parent=0 // pred_check_branch
    %27 = sbr.rel (0) target = $region25
  $region24: #{sentiment_clip_forward.1} parent=0 // pred_region
    _
  $region25: #{sentiment_clip_forward.1} parent=0 // pred_fallthru
    _
  // Predicated region
  $region26: #{sentiment_clip_forward.1} parent=0 // pred_check
    _
  $region27: #{sentiment_clip_forward.1} parent=0 // pred_check_branch
    %29 = sbr.rel (0) target = $region29
  $region28: #{sentiment_clip_forward.1} parent=0 // pred_region
    _
  $region29: #{sentiment_clip_forward.1} parent=0 // pred_fallthru
    _
  // Predicated region
  $region30: #{sentiment_clip_forward.1} parent=0 // pred_check
    _
  $region31: #{sentiment_clip_forward.1} parent=0 // pred_check_branch
    %31 = sbr.rel (0) target = $region33
  $region32: #{sentiment_clip_forward.1} parent=0 // pred_region
    _
  $region33: #{sentiment_clip_forward.1} parent=0 // pred_fallthru
    _
  // Predicated region
  $region34: #{sentiment_clip_forward.1} parent=0 // pred_check
    _
  $region35: #{sentiment_clip_forward.1} parent=0 // pred_check_branch
    %33 = sbr.rel (0) target = $region37
  $region36: #{sentiment_clip_forward.1} parent=0 // pred_region
    _
  $region37: #{sentiment_clip_forward.1} parent=0 // pred_fallthru
    _
  // Predicated region
  $region38: #{sentiment_clip_forward.1} parent=0 // pred_check
    _
  $region39: #{sentiment_clip_forward.1} parent=0 // pred_check_branch
    %35 = sbr.rel (0) target = $region41
  $region40: #{sentiment_clip_forward.1} parent=0 // pred_region
    _
  $region41: #{sentiment_clip_forward.1} parent=0 // pred_fallthru
    _
  // Predicated region
  $region42: #{sentiment_clip_forward.1} parent=0 // pred_check
    _
  $region43: #{sentiment_clip_forward.1} parent=0 // pred_check_branch
    %37 = sbr.rel (0) target = $region45
  $region44: #{sentiment_clip_forward.1} parent=0 // pred_region
    _
  $region45: #{sentiment_clip_forward.1} parent=0 // pred_fallthru
    _
  %v39 = vld [vmem:[%s0] sm:$0xff]
  %v40 = vld [vmem:[%s0 + $0x8] sm:$0xff]
  %v41 = vld [vmem:[%s0 + $0x10] sm:$0xff]
  %v42 = vld [vmem:[%s0 + $0x18] sm:$0xff]
  %v43 = vld [vmem:[%s2] sm:$0xf]
  %v44 = vld [vmem:[%s2 + $0x4] sm:$0xf]
  %v45 = vld [vmem:[%s2 + $0x8] sm:$0xf]
  %v46 = vld [vmem:[%s2 + $0xc] sm:$0xf]
  %v47 = vld [vmem:[%s2 + $0x10] sm:$0xf]
  %v48 = vld [vmem:[%s2 + $0x14] sm:$0xf]
  %v49 = vld [vmem:[%s2 + $0x18] sm:$0xf]
  %v50 = vld [vmem:[%s2 + $0x1c] sm:$0xf]
  %v51 = vld [vmem:[%s2 + $0x20] sm:$0xf]
  %v52 = vld [vmem:[%s2 + $0x24] sm:$0xf]
  %v53 = vld [vmem:[%s2 + $0x28] sm:$0xf]
  %v54 = vld [vmem:[%s2 + $0x2c] sm:$0xf]
  %v55 = vld [vmem:[%s2 + $0x30] sm:$0xf]
  %v56 = vld [vmem:[%s2 + $0x34] sm:$0xf]
  %v57 = vld [vmem:[%s2 + $0x38] sm:$0xf]
  %v58 = vld [vmem:[%s2 + $0x3c] sm:$0xf]
  %v59 = vld [vmem:[%s2 + $0x40] sm:$0xf]
  %v60 = vld [vmem:[%s2 + $0x44] sm:$0xf]
  %v61 = vld [vmem:[%s2 + $0x48] sm:$0xf]
  %v62 = vld [vmem:[%s2 + $0x4c] sm:$0xf]
  %v63 = vld [vmem:[%s2 + $0x50] sm:$0xf]
  %v64 = vld [vmem:[%s2 + $0x54] sm:$0xf]
  %v65 = vld [vmem:[%s2 + $0x58] sm:$0xf]
  %v66 = vld [vmem:[%s2 + $0x5c] sm:$0xf]
  %v67 = vld [vmem:[%s2 + $0x60] sm:$0xf]
  %v68 = vld [vmem:[%s2 + $0x64] sm:$0xf]
  %v69 = vld [vmem:[%s2 + $0x68] sm:$0xf]
  %v70 = vld [vmem:[%s2 + $0x6c] sm:$0xf]
  %v71 = vld [vmem:[%s2 + $0x70] sm:$0xf]
  %v72 = vld [vmem:[%s2 + $0x74] sm:$0xf]
  %v73 = vld [vmem:[%s2 + $0x78] sm:$0xf]
  %v74 = vld [vmem:[%s2 + $0x7c] sm:$0xf]
  %v75 = vld [vmem:[%s2 + $0x80] sm:$0xf]
  %v76 = vld [vmem:[%s2 + $0x84] sm:$0xf]
  %v77 = vld [vmem:[%s2 + $0x88] sm:$0xf]
  %v78 = vld [vmem:[%s2 + $0x8c] sm:$0xf]
  %v79 = vld [vmem:[%s2 + $0x90] sm:$0xf]
  %v80 = vld [vmem:[%s2 + $0x94] sm:$0xf]
  %v81 = vld [vmem:[%s2 + $0x98] sm:$0xf]
  %v82 = vld [vmem:[%s2 + $0x9c] sm:$0xf]
  %v83 = vld [vmem:[%s2 + $0xa0] sm:$0xf]
  %v84 = vld [vmem:[%s2 + $0xa4] sm:$0xf]
  %v85 = vld [vmem:[%s2 + $0xa8] sm:$0xf]
  %v86 = vld [vmem:[%s2 + $0xac] sm:$0xf]
  %v87 = vld [vmem:[%s2 + $0xb0] sm:$0xf]
  %v88 = vld [vmem:[%s2 + $0xb4] sm:$0xf]
  %v89 = vld [vmem:[%s2 + $0xb8] sm:$0xf]
  %v90 = vld [vmem:[%s2 + $0xbc] sm:$0xf]
  %v91 = vld [vmem:[%s2 + $0xc0] sm:$0xf]
  %v92 = vld [vmem:[%s2 + $0xc4] sm:$0xf]
  %v93 = vld [vmem:[%s2 + $0xc8] sm:$0xf]
  %v94 = vld [vmem:[%s2 + $0xcc] sm:$0xf]
  %v95 = vld [vmem:[%s2 + $0xd0] sm:$0xf]
  %v96 = vld [vmem:[%s2 + $0xd4] sm:$0xf]
  %v97 = vld [vmem:[%s2 + $0xd8] sm:$0xf]
  %v98 = vld [vmem:[%s2 + $0xdc] sm:$0xf]
  %v99 = vld [vmem:[%s2 + $0xe0] sm:$0xf]
  %v100 = vld [vmem:[%s2 + $0xe4] sm:$0xf]
  %v101 = vld [vmem:[%s2 + $0xe8] sm:$0xf]
  %v102 = vld [vmem:[%s2 + $0xec] sm:$0xf]
  %v103 = vld [vmem:[%s2 + $0xf0] sm:$0xf]
  %v104 = vld [vmem:[%s2 + $0xf4] sm:$0xf]
  %v105 = vld [vmem:[%s2 + $0xf8] sm:$0xf]
  %v106 = vld [vmem:[%s2 + $0xfc] sm:$0xf]
  %v107 = vld [vmem:[%s2 + $0x100] sm:$0xf]
  %v108 = vld [vmem:[%s2 + $0x104] sm:$0xf]
  %v109 = vld [vmem:[%s2 + $0x108] sm:$0xf]
  %v110 = vld [vmem:[%s2 + $0x10c] sm:$0xf]
  %v111 = vld [vmem:[%s2 + $0x110] sm:$0xf]
  %v112 = vld [vmem:[%s2 + $0x114] sm:$0xf]
  %v113 = vld [vmem:[%s2 + $0x118] sm:$0xf]
  %v114 = vld [vmem:[%s2 + $0x11c] sm:$0xf]
  %v115 = vld [vmem:[%s2 + $0x120] sm:$0xf]
  %v116 = vld [vmem:[%s2 + $0x124] sm:$0xf]
  %v117 = vld [vmem:[%s2 + $0x128] sm:$0xf]
  %v118 = vld [vmem:[%s2 + $0x12c] sm:$0xf]
  %v119 = vld [vmem:[%s2 + $0x130] sm:$0xf]
  %v120 = vld [vmem:[%s2 + $0x134] sm:$0xf]
  %v121 = vld [vmem:[%s2 + $0x138] sm:$0xf]
  %v122 = vld [vmem:[%s2 + $0x13c] sm:$0xf]
  %v123 = vld [vmem:[%s2 + $0x140] sm:$0xf]
  %v124 = vld [vmem:[%s2 + $0x144] sm:$0xf]
  %v125 = vld [vmem:[%s2 + $0x148] sm:$0xf]
  %v126 = vld [vmem:[%s2 + $0x14c] sm:$0xf]
  %v127 = vld [vmem:[%s2 + $0x150] sm:$0xf]
  %v128 = vld [vmem:[%s2 + $0x154] sm:$0xf]
  %v129 = vld [vmem:[%s2 + $0x158] sm:$0xf]
  %v130 = vld [vmem:[%s2 + $0x15c] sm:$0xf]
  %v131 = vld [vmem:[%s2 + $0x160] sm:$0xf]
  %v132 = vld [vmem:[%s2 + $0x164] sm:$0xf]
  %v133 = vld [vmem:[%s2 + $0x168] sm:$0xf]
  %v134 = vld [vmem:[%s2 + $0x16c] sm:$0xf]
  %v135 = vld [vmem:[%s2 + $0x170] sm:$0xf]
  %v136 = vld [vmem:[%s2 + $0x174] sm:$0xf]
  %v137 = vld [vmem:[%s2 + $0x178] sm:$0xf]
  %v138 = vld [vmem:[%s2 + $0x17c] sm:$0xf]
  %v139 = vld [vmem:[%s2 + $0x180] sm:$0xf]
  %v140 = vld [vmem:[%s2 + $0x184] sm:$0xf]
  %v141 = vld [vmem:[%s2 + $0x188] sm:$0xf]
  %v142 = vld [vmem:[%s2 + $0x18c] sm:$0xf]
  %v143 = vld [vmem:[%s2 + $0x190] sm:$0xf]
  %v144 = vld [vmem:[%s2 + $0x194] sm:$0xf]
  %v145 = vld [vmem:[%s2 + $0x198] sm:$0xf]
  %v146 = vld [vmem:[%s2 + $0x19c] sm:$0xf]
  %v147 = vld [vmem:[%s2 + $0x1a0] sm:$0xf]
  %v148 = vld [vmem:[%s2 + $0x1a4] sm:$0xf]
  %v149 = vld [vmem:[%s2 + $0x1a8] sm:$0xf]
  %v150 = vld [vmem:[%s2 + $0x1ac] sm:$0xf]
  %v151 = vld [vmem:[%s2 + $0x1b0] sm:$0xf]
  %v152 = vld [vmem:[%s2 + $0x1b4] sm:$0xf]
  %v153 = vld [vmem:[%s2 + $0x1b8] sm:$0xf]
  %v154 = vld [vmem:[%s2 + $0x1bc] sm:$0xf]
  %v155 = vld [vmem:[%s2 + $0x1c0] sm:$0xf]
  %v156 = vld [vmem:[%s2 + $0x1c4] sm:$0xf]
  %v157 = vld [vmem:[%s2 + $0x1c8] sm:$0xf]
  %v158 = vld [vmem:[%s2 + $0x1cc] sm:$0xf]
  %v159 = vld [vmem:[%s2 + $0x1d0] sm:$0xf]
  %v160 = vld [vmem:[%s2 + $0x1d4] sm:$0xf]
  %v161 = vld [vmem:[%s2 + $0x1d8] sm:$0xf]
  %v162 = vld [vmem:[%s2 + $0x1dc] sm:$0xf]
  %v163 = vld [vmem:[%s2 + $0x1e0] sm:$0xf]
  %v164 = vld [vmem:[%s2 + $0x1e4] sm:$0xf]
  %v165 = vld [vmem:[%s2 + $0x1e8] sm:$0xf]
  %v166 = vld [vmem:[%s2 + $0x1ec] sm:$0xf]
  %v167 = vld [vmem:[%s2 + $0x1f0] sm:$0xf]
  %v168 = vld [vmem:[%s2 + $0x1f4] sm:$0xf]
  %v169 = vld [vmem:[%s2 + $0x1f8] sm:$0xf]
  %v170 = vld [vmem:[%s2 + $0x1fc] sm:$0xf]
  %v175 = vunpack.c.l.b16 %v39
  %v176 = vunpack.c.h.b16 %v39
  %v177 = vunpack.c.l.b16 %v40
  %v178 = vunpack.c.h.b16 %v40
  %v179 = vunpack.c.l.b16 %v41
  %v180 = vunpack.c.h.b16 %v41
  %v181 = vunpack.c.l.b16 %v42
  %v182 = vunpack.c.h.b16 %v42
  %v183 = vpack.c.b16 %v175, %v175
  %v184 = vpack.c.b16 %v176, %v176
  %v185 = vpack.c.b16 %v177, %v177
  %v186 = vpack.c.b16 %v178, %v178
  %v187 = vpack.c.b16 %v179, %v179
  %v188 = vpack.c.b16 %v180, %v180
  %v189 = vpack.c.b16 %v181, %v181
  %v190 = vpack.c.b16 %v182, %v182
  %v327 = vunpack.c.l.b16 %v43
  %v328 = vunpack.c.l.b16 %v44
  %v329 = vunpack.c.l.b16 %v45
  %v330 = vunpack.c.l.b16 %v46
  %v331 = vunpack.c.l.b16 %v47
  %v332 = vunpack.c.l.b16 %v48
  %v333 = vunpack.c.l.b16 %v49
  %v334 = vunpack.c.l.b16 %v50
  %v335 = vunpack.c.l.b16 %v51
  %v336 = vunpack.c.l.b16 %v52
  %v337 = vunpack.c.l.b16 %v53
  %v338 = vunpack.c.l.b16 %v54
  %v339 = vunpack.c.l.b16 %v55
  %v340 = vunpack.c.l.b16 %v56
  %v341 = vunpack.c.l.b16 %v57
  %v342 = vunpack.c.l.b16 %v58
  %v343 = vunpack.c.l.b16 %v59
  %v344 = vunpack.c.l.b16 %v60
  %v345 = vunpack.c.l.b16 %v61
  %v346 = vunpack.c.l.b16 %v62
  %v347 = vunpack.c.l.b16 %v63
  %v348 = vunpack.c.l.b16 %v64
  %v349 = vunpack.c.l.b16 %v65
  %v350 = vunpack.c.l.b16 %v66
  %v351 = vunpack.c.l.b16 %v67
  %v352 = vunpack.c.l.b16 %v68
  %v353 = vunpack.c.l.b16 %v69
  %v354 = vunpack.c.l.b16 %v70
  %v355 = vunpack.c.l.b16 %v71
  %v356 = vunpack.c.l.b16 %v72
  %v357 = vunpack.c.l.b16 %v73
  %v358 = vunpack.c.l.b16 %v74
  %v359 = vunpack.c.l.b16 %v75
  %v360 = vunpack.c.l.b16 %v76
  %v361 = vunpack.c.l.b16 %v77
  %v362 = vunpack.c.l.b16 %v78
  %v363 = vunpack.c.l.b16 %v79
  %v364 = vunpack.c.l.b16 %v80
  %v365 = vunpack.c.l.b16 %v81
  %v366 = vunpack.c.l.b16 %v82
  %v367 = vunpack.c.l.b16 %v83
  %v368 = vunpack.c.l.b16 %v84
  %v369 = vunpack.c.l.b16 %v85
  %v370 = vunpack.c.l.b16 %v86
  %v371 = vunpack.c.l.b16 %v87
  %v372 = vunpack.c.l.b16 %v88
  %v373 = vunpack.c.l.b16 %v89
  %v374 = vunpack.c.l.b16 %v90
  %v375 = vunpack.c.l.b16 %v91
  %v376 = vunpack.c.l.b16 %v92
  %v377 = vunpack.c.l.b16 %v93
  %v378 = vunpack.c.l.b16 %v94
  %v379 = vunpack.c.l.b16 %v95
  %v380 = vunpack.c.l.b16 %v96
  %v381 = vunpack.c.l.b16 %v97
  %v382 = vunpack.c.l.b16 %v98
  %v383 = vunpack.c.l.b16 %v99
  %v384 = vunpack.c.l.b16 %v100
  %v385 = vunpack.c.l.b16 %v101
  %v386 = vunpack.c.l.b16 %v102
  %v387 = vunpack.c.l.b16 %v103
  %v388 = vunpack.c.l.b16 %v104
  %v389 = vunpack.c.l.b16 %v105
  %v390 = vunpack.c.l.b16 %v106
  %v391 = vunpack.c.l.b16 %v107
  %v392 = vunpack.c.l.b16 %v108
  %v393 = vunpack.c.l.b16 %v109
  %v394 = vunpack.c.l.b16 %v110
  %v395 = vunpack.c.l.b16 %v111
  %v396 = vunpack.c.l.b16 %v112
  %v397 = vunpack.c.l.b16 %v113
  %v398 = vunpack.c.l.b16 %v114
  %v399 = vunpack.c.l.b16 %v115
  %v400 = vunpack.c.l.b16 %v116
  %v401 = vunpack.c.l.b16 %v117
  %v402 = vunpack.c.l.b16 %v118
  %v403 = vunpack.c.l.b16 %v119
  %v404 = vunpack.c.l.b16 %v120
  %v405 = vunpack.c.l.b16 %v121
  %v406 = vunpack.c.l.b16 %v122
  %v407 = vunpack.c.l.b16 %v123
  %v408 = vunpack.c.l.b16 %v124
  %v409 = vunpack.c.l.b16 %v125
  %v410 = vunpack.c.l.b16 %v126
  %v411 = vunpack.c.l.b16 %v127
  %v412 = vunpack.c.l.b16 %v128
  %v413 = vunpack.c.l.b16 %v129
  %v414 = vunpack.c.l.b16 %v130
  %v415 = vunpack.c.l.b16 %v131
  %v416 = vunpack.c.l.b16 %v132
  %v417 = vunpack.c.l.b16 %v133
  %v418 = vunpack.c.l.b16 %v134
  %v419 = vunpack.c.l.b16 %v135
  %v420 = vunpack.c.l.b16 %v136
  %v421 = vunpack.c.l.b16 %v137
  %v422 = vunpack.c.l.b16 %v138
  %v423 = vunpack.c.l.b16 %v139
  %v424 = vunpack.c.l.b16 %v140
  %v425 = vunpack.c.l.b16 %v141
  %v426 = vunpack.c.l.b16 %v142
  %v427 = vunpack.c.l.b16 %v143
  %v428 = vunpack.c.l.b16 %v144
  %v429 = vunpack.c.l.b16 %v145
  %v430 = vunpack.c.l.b16 %v146
  %v431 = vunpack.c.l.b16 %v147
  %v432 = vunpack.c.l.b16 %v148
  %v433 = vunpack.c.l.b16 %v149
  %v434 = vunpack.c.l.b16 %v150
  %v435 = vunpack.c.l.b16 %v151
  %v436 = vunpack.c.l.b16 %v152
  %v437 = vunpack.c.l.b16 %v153
  %v438 = vunpack.c.l.b16 %v154
  %v439 = vunpack.c.l.b16 %v155
  %v440 = vunpack.c.l.b16 %v156
  %v441 = vunpack.c.l.b16 %v157
  %v442 = vunpack.c.l.b16 %v158
  %v443 = vunpack.c.l.b16 %v159
  %v444 = vunpack.c.l.b16 %v160
  %v445 = vunpack.c.l.b16 %v161
  %v446 = vunpack.c.l.b16 %v162
  %v447 = vunpack.c.l.b16 %v163
  %v448 = vunpack.c.l.b16 %v164
  %v449 = vunpack.c.l.b16 %v165
  %v450 = vunpack.c.l.b16 %v166
  %v451 = vunpack.c.l.b16 %v167
  %v452 = vunpack.c.l.b16 %v168
  %v453 = vunpack.c.l.b16 %v169
  %v454 = vunpack.c.l.b16 %v170
  %v455 = vpack.c.b16 %v328, %v327
  %v456 = vpack.c.b16 %v330, %v329
  %v457 = vpack.c.b16 %v332, %v331
  %v458 = vpack.c.b16 %v334, %v333
  %v459 = vpack.c.b16 %v336, %v335
  %v460 = vpack.c.b16 %v338, %v337
  %v461 = vpack.c.b16 %v340, %v339
  %v462 = vpack.c.b16 %v342, %v341
  %v463 = vpack.c.b16 %v344, %v343
  %v464 = vpack.c.b16 %v346, %v345
  %v465 = vpack.c.b16 %v348, %v347
  %v466 = vpack.c.b16 %v350, %v349
  %v467 = vpack.c.b16 %v352, %v351
  %v468 = vpack.c.b16 %v354, %v353
  %v469 = vpack.c.b16 %v356, %v355
  %v470 = vpack.c.b16 %v358, %v357
  %v471 = vpack.c.b16 %v360, %v359
  %v472 = vpack.c.b16 %v362, %v361
  %v473 = vpack.c.b16 %v364, %v363
  %v474 = vpack.c.b16 %v366, %v365
  %v475 = vpack.c.b16 %v368, %v367
  %v476 = vpack.c.b16 %v370, %v369
  %v477 = vpack.c.b16 %v372, %v371
  %v478 = vpack.c.b16 %v374, %v373
  %v479 = vpack.c.b16 %v376, %v375
  %v480 = vpack.c.b16 %v378, %v377
  %v481 = vpack.c.b16 %v380, %v379
  %v482 = vpack.c.b16 %v382, %v381
  %v483 = vpack.c.b16 %v384, %v383
  %v484 = vpack.c.b16 %v386, %v385
  %v485 = vpack.c.b16 %v388, %v387
  %v486 = vpack.c.b16 %v390, %v389
  %v487 = vpack.c.b16 %v392, %v391
  %v488 = vpack.c.b16 %v394, %v393
  %v489 = vpack.c.b16 %v396, %v395
  %v490 = vpack.c.b16 %v398, %v397
  %v491 = vpack.c.b16 %v400, %v399
  %v492 = vpack.c.b16 %v402, %v401
  %v493 = vpack.c.b16 %v404, %v403
  %v494 = vpack.c.b16 %v406, %v405
  %v495 = vpack.c.b16 %v408, %v407
  %v496 = vpack.c.b16 %v410, %v409
  %v497 = vpack.c.b16 %v412, %v411
  %v498 = vpack.c.b16 %v414, %v413
  %v499 = vpack.c.b16 %v416, %v415
  %v500 = vpack.c.b16 %v418, %v417
  %v501 = vpack.c.b16 %v420, %v419
  %v502 = vpack.c.b16 %v422, %v421
  %v503 = vpack.c.b16 %v424, %v423
  %v504 = vpack.c.b16 %v426, %v425
  %v505 = vpack.c.b16 %v428, %v427
  %v506 = vpack.c.b16 %v430, %v429
  %v507 = vpack.c.b16 %v432, %v431
  %v508 = vpack.c.b16 %v434, %v433
  %v509 = vpack.c.b16 %v436, %v435
  %v510 = vpack.c.b16 %v438, %v437
  %v511 = vpack.c.b16 %v440, %v439
  %v512 = vpack.c.b16 %v442, %v441
  %v513 = vpack.c.b16 %v444, %v443
  %v514 = vpack.c.b16 %v446, %v445
  %v515 = vpack.c.b16 %v448, %v447
  %v516 = vpack.c.b16 %v450, %v449
  %v517 = vpack.c.b16 %v452, %v451
  %v518 = vpack.c.b16 %v454, %v453
  %583 = vmatprep.subr.bf16.mxu0 0
  %584 = vmatpush1.bf16.msra.mxu0 %v455
  %585 = vmatprep.subr.bf16.mxu0 0
  %586 = vmatpush1.bf16.msra.mxu0 %v456
  %587 = vmatprep.subr.bf16.mxu0 0
  %588 = vmatpush1.bf16.msra.mxu0 %v457
  %589 = vmatprep.subr.bf16.mxu0 0
  %590 = vmatpush1.bf16.msra.mxu0 %v458
  %591 = vmatprep.subr.bf16.mxu0 0
  %592 = vmatpush1.bf16.msra.mxu0 %v459
  %593 = vmatprep.subr.bf16.mxu0 0
  %594 = vmatpush1.bf16.msra.mxu0 %v460
  %595 = vmatprep.subr.bf16.mxu0 0
  %596 = vmatpush1.bf16.msra.mxu0 %v461
  %597 = vmatprep.subr.bf16.mxu0 0
  %598 = vmatpush1.bf16.msra.mxu0 %v462
  %599 = vmatprep.subr.bf16.mxu0 0
  %600 = vmatpush1.bf16.msra.mxu0 %v463
  %601 = vmatprep.subr.bf16.mxu0 0
  %602 = vmatpush1.bf16.msra.mxu0 %v464
  %603 = vmatprep.subr.bf16.mxu0 0
  %604 = vmatpush1.bf16.msra.mxu0 %v465
  %605 = vmatprep.subr.bf16.mxu0 0
  %606 = vmatpush1.bf16.msra.mxu0 %v466
  %607 = vmatprep.subr.bf16.mxu0 0
  %608 = vmatpush1.bf16.msra.mxu0 %v467
  %609 = vmatprep.subr.bf16.mxu0 0
  %610 = vmatpush1.bf16.msra.mxu0 %v468
  %611 = vmatprep.subr.bf16.mxu0 0
  %612 = vmatpush1.bf16.msra.mxu0 %v469
  %613 = vmatprep.subr.bf16.mxu0 0
  %614 = vmatpush1.bf16.msra.mxu0 %v470
  %615 = vmatprep.mubr.bf16.mxu0 %v184
  %616 = vmatmul.mubr.bf16.gmra.mrb[0].mxu0 %v183
  %v617 = vpop.f32.mrb[0].mxu0
  %v618 = vadd.f32 0.0, %v617
  %v619 = vpop.f32.mrb[0].mxu0
  %v620 = vpop.f32.mrb[0].mxu0
  %v621 = vpop.f32.mrb[0].mxu0
  %622 = vdwg.mxu0
  %623 = vmatprep.subr.bf16.mxu0 0
  %624 = vmatpush1.bf16.msra.mxu0 %v471
  %625 = vmatprep.subr.bf16.mxu0 0
  %626 = vmatpush1.bf16.msra.mxu0 %v472
  %627 = vmatprep.subr.bf16.mxu0 0
  %628 = vmatpush1.bf16.msra.mxu0 %v473
  %629 = vmatprep.subr.bf16.mxu0 0
  %630 = vmatpush1.bf16.msra.mxu0 %v474
  %631 = vmatprep.subr.bf16.mxu0 0
  %632 = vmatpush1.bf16.msra.mxu0 %v475
  %633 = vmatprep.subr.bf16.mxu0 0
  %634 = vmatpush1.bf16.msra.mxu0 %v476
  %635 = vmatprep.subr.bf16.mxu0 0
  %636 = vmatpush1.bf16.msra.mxu0 %v477
  %637 = vmatprep.subr.bf16.mxu0 0
  %638 = vmatpush1.bf16.msra.mxu0 %v478
  %639 = vmatprep.subr.bf16.mxu0 0
  %640 = vmatpush1.bf16.msra.mxu0 %v479
  %641 = vmatprep.subr.bf16.mxu0 0
  %642 = vmatpush1.bf16.msra.mxu0 %v480
  %643 = vmatprep.subr.bf16.mxu0 0
  %644 = vmatpush1.bf16.msra.mxu0 %v481
  %645 = vmatprep.subr.bf16.mxu0 0
  %646 = vmatpush1.bf16.msra.mxu0 %v482
  %647 = vmatprep.subr.bf16.mxu0 0
  %648 = vmatpush1.bf16.msra.mxu0 %v483
  %649 = vmatprep.subr.bf16.mxu0 0
  %650 = vmatpush1.bf16.msra.mxu0 %v484
  %651 = vmatprep.subr.bf16.mxu0 0
  %652 = vmatpush1.bf16.msra.mxu0 %v485
  %653 = vmatprep.subr.bf16.mxu0 0
  %654 = vmatpush1.bf16.msra.mxu0 %v486
  %655 = vmatprep.mubr.bf16.mxu0 %v186
  %656 = vmatmul.mubr.bf16.gmra.mrb[0].mxu0 %v185
  %v657 = vpop.f32.mrb[0].mxu0
  %v658 = vadd.f32 %v618, %v657
  %v659 = vpop.f32.mrb[0].mxu0
  %v660 = vpop.f32.mrb[0].mxu0
  %v661 = vpop.f32.mrb[0].mxu0
  %662 = vdwg.mxu0
  %663 = vmatprep.subr.bf16.mxu0 0
  %664 = vmatpush1.bf16.msra.mxu0 %v487
  %665 = vmatprep.subr.bf16.mxu0 0
  %666 = vmatpush1.bf16.msra.mxu0 %v488
  %667 = vmatprep.subr.bf16.mxu0 0
  %668 = vmatpush1.bf16.msra.mxu0 %v489
  %669 = vmatprep.subr.bf16.mxu0 0
  %670 = vmatpush1.bf16.msra.mxu0 %v490
  %671 = vmatprep.subr.bf16.mxu0 0
  %672 = vmatpush1.bf16.msra.mxu0 %v491
  %673 = vmatprep.subr.bf16.mxu0 0
  %674 = vmatpush1.bf16.msra.mxu0 %v492
  %675 = vmatprep.subr.bf16.mxu0 0
  %676 = vmatpush1.bf16.msra.mxu0 %v493
  %677 = vmatprep.subr.bf16.mxu0 0
  %678 = vmatpush1.bf16.msra.mxu0 %v494
  %679 = vmatprep.subr.bf16.mxu0 0
  %680 = vmatpush1.bf16.msra.mxu0 %v495
  %681 = vmatprep.subr.bf16.mxu0 0
  %682 = vmatpush1.bf16.msra.mxu0 %v496
  %683 = vmatprep.subr.bf16.mxu0 0
  %684 = vmatpush1.bf16.msra.mxu0 %v497
  %685 = vmatprep.subr.bf16.mxu0 0
  %686 = vmatpush1.bf16.msra.mxu0 %v498
  %687 = vmatprep.subr.bf16.mxu0 0
  %688 = vmatpush1.bf16.msra.mxu0 %v499
  %689 = vmatprep.subr.bf16.mxu0 0
  %690 = vmatpush1.bf16.msra.mxu0 %v500
  %691 = vmatprep.subr.bf16.mxu0 0
  %692 = vmatpush1.bf16.msra.mxu0 %v501
  %693 = vmatprep.subr.bf16.mxu0 0
  %694 = vmatpush1.bf16.msra.mxu0 %v502
  %695 = vmatprep.mubr.bf16.mxu0 %v188
  %696 = vmatmul.mubr.bf16.gmra.mrb[0].mxu0 %v187
  %v697 = vpop.f32.mrb[0].mxu0
  %v698 = vadd.f32 %v658, %v697
  %v699 = vpop.f32.mrb[0].mxu0
  %v700 = vpop.f32.mrb[0].mxu0
  %v701 = vpop.f32.mrb[0].mxu0
  %702 = vdwg.mxu0
  %703 = vmatprep.subr.bf16.mxu0 0
  %704 = vmatpush1.bf16.msra.mxu0 %v503
  %705 = vmatprep.subr.bf16.mxu0 0
  %706 = vmatpush1.bf16.msra.mxu0 %v504
  %707 = vmatprep.subr.bf16.mxu0 0
  %708 = vmatpush1.bf16.msra.mxu0 %v505
  %709 = vmatprep.subr.bf16.mxu0 0
  %710 = vmatpush1.bf16.msra.mxu0 %v506
  %711 = vmatprep.subr.bf16.mxu0 0
  %712 = vmatpush1.bf16.msra.mxu0 %v507
  %713 = vmatprep.subr.bf16.mxu0 0
  %714 = vmatpush1.bf16.msra.mxu0 %v508
  %715 = vmatprep.subr.bf16.mxu0 0
  %716 = vmatpush1.bf16.msra.mxu0 %v509
  %717 = vmatprep.subr.bf16.mxu0 0
  %718 = vmatpush1.bf16.msra.mxu0 %v510
  %719 = vmatprep.subr.bf16.mxu0 0
  %720 = vmatpush1.bf16.msra.mxu0 %v511
  %721 = vmatprep.subr.bf16.mxu0 0
  %722 = vmatpush1.bf16.msra.mxu0 %v512
  %723 = vmatprep.subr.bf16.mxu0 0
  %724 = vmatpush1.bf16.msra.mxu0 %v513
  %725 = vmatprep.subr.bf16.mxu0 0
  %726 = vmatpush1.bf16.msra.mxu0 %v514
  %727 = vmatprep.subr.bf16.mxu0 0
  %728 = vmatpush1.bf16.msra.mxu0 %v515
  %729 = vmatprep.subr.bf16.mxu0 0
  %730 = vmatpush1.bf16.msra.mxu0 %v516
  %731 = vmatprep.subr.bf16.mxu0 0
  %732 = vmatpush1.bf16.msra.mxu0 %v517
  %733 = vmatprep.subr.bf16.mxu0 0
  %734 = vmatpush1.bf16.msra.mxu0 %v518
  %735 = vmatprep.mubr.bf16.mxu0 %v190
  %736 = vmatmul.mubr.bf16.gmra.mrb[0].mxu0 %v189
  %v737 = vpop.f32.mrb[0].mxu0
  %v738 = vadd.f32 %v698, %v737
  %v739 = vpop.f32.mrb[0].mxu0
  %v740 = vpop.f32.mrb[0].mxu0
  %v741 = vpop.f32.mrb[0].mxu0
  %742 = vdwg.mxu0
  %v743 = vld [vmem:[%s1] sm:$0xf]
  %v744 = vld [vmem:[%s3] sm:$0xf]
  %v745 = vld [vmem:[%s3 + $0x4] sm:$0xf]
  %v746 = vld [vmem:[%s3 + $0x8] sm:$0xf]
  %v747 = vld [vmem:[%s3 + $0xc] sm:$0xf]
  %v752 = vunpack.c.l.b16 %v744
  %v753 = vunpack.c.l.b16 %v745
  %v754 = vunpack.c.l.b16 %v746
  %v755 = vunpack.c.l.b16 %v747
  %v756 = vpack.c.b16 %v753, %v752
  %v757 = vpack.c.b16 %v755, %v754
  %vm760 = vcmask 261120
  %v762 = vsel %vm760, %v743, 0
  %764 = vmatprep.subr.bf16.mxu0 0
  %765 = vmatpush1.bf16.msra.mxu0 %v756
  %766 = vmatprep.subr.bf16.mxu0 0
  %767 = vmatpush1.bf16.msra.mxu0 %v757
  %768 = vmatprep.subr.bf16.mxu0 0
  %769 = vmatpush1.bf16.msra.mxu0 0
  %770 = vmatprep.subr.bf16.mxu0 0
  %771 = vmatpush1.bf16.msra.mxu0 0
  %772 = vmatprep.subr.bf16.mxu0 0
  %773 = vmatpush1.bf16.msra.mxu0 0
  %774 = vmatprep.subr.bf16.mxu0 0
  %775 = vmatpush1.bf16.msra.mxu0 0
  %776 = vmatprep.subr.bf16.mxu0 0
  %777 = vmatpush1.bf16.msra.mxu0 0
  %778 = vmatprep.subr.bf16.mxu0 0
  %779 = vmatpush1.bf16.msra.mxu0 0
  %780 = vmatprep.subr.bf16.mxu0 0
  %781 = vmatpush1.bf16.msra.mxu0 0
  %782 = vmatprep.subr.bf16.mxu0 0
  %783 = vmatpush1.bf16.msra.mxu0 0
  %784 = vmatprep.subr.bf16.mxu0 0
  %785 = vmatpush1.bf16.msra.mxu0 0
  %786 = vmatprep.subr.bf16.mxu0 0
  %787 = vmatpush1.bf16.msra.mxu0 0
  %788 = vmatprep.subr.bf16.mxu0 0
  %789 = vmatpush1.bf16.msra.mxu0 0
  %790 = vmatprep.subr.bf16.mxu0 0
  %791 = vmatpush1.bf16.msra.mxu0 0
  %792 = vmatprep.subr.bf16.mxu0 0
  %793 = vmatpush1.bf16.msra.mxu0 0
  %794 = vmatprep.subr.bf16.mxu0 0
  %795 = vmatpush1.bf16.msra.mxu0 0
  %796 = vmatprep.mubr.bf16.mxu0 0
  %797 = vmatmul.mubr.bf16.gmra.mrb[0].mxu0 %v762
  %v798 = vpop.f32.mrb[0].mxu0
  %v799 = vadd.f32 0.0, %v798
  %v800 = vpop.f32.mrb[0].mxu0
  %v801 = vpop.f32.mrb[0].mxu0
  %v802 = vpop.f32.mrb[0].mxu0
  %803 = vdwg.mxu0
  %v804 = vpack.c.bf16 %v738, %v738
  %v805 = vld [vmem:[%s4] sm:$0xff]
  %v806 = vld [vmem:[%s4 + $0x8] sm:$0xff]
  %v807 = vld [vmem:[%s4 + $0x10] sm:$0xff]
  %v808 = vld [vmem:[%s4 + $0x18] sm:$0xff]
  %v809 = vpack.c.bf16 %v799, %v799
  %v810 = vld [vmem:[%s5] sm:$0xff]
  %v811 = vld [vmem:[%s5 + $0x8] sm:$0xff]
  %v812 = vld [vmem:[%s5 + $0x10] sm:$0xff]
  %v813 = vld [vmem:[%s5 + $0x18] sm:$0xff]
  %v818 = vunpack.c.l.b16 %v810
  %v819 = vunpack.c.h.b16 %v810
  %v820 = vunpack.c.l.b16 %v811
  %v821 = vunpack.c.h.b16 %v811
  %v822 = vunpack.c.l.b16 %v812
  %v823 = vunpack.c.h.b16 %v812
  %v824 = vunpack.c.l.b16 %v813
  %v825 = vunpack.c.h.b16 %v813
  %v826 = vpack.c.b16 %v820, %v818
  %v827 = vpack.c.b16 %v821, %v819
  %v828 = vpack.c.b16 %v824, %v822
  %v829 = vpack.c.b16 %v825, %v823
  %v835 = vsel %vm760, %v809, 0
  %837 = vmatprep.subr.bf16.mxu0 %v827
  %838 = vmatpush1.bf16.msra.mxu0 %v826
  %839 = vmatprep.subr.bf16.mxu0 %v829
  %840 = vmatpush1.bf16.msra.mxu0 %v828
  %841 = vmatprep.subr.bf16.mxu0 0
  %842 = vmatpush1.bf16.msra.mxu0 0
  %843 = vmatprep.subr.bf16.mxu0 0
  %844 = vmatpush1.bf16.msra.mxu0 0
  %845 = vmatprep.subr.bf16.mxu0 0
  %846 = vmatpush1.bf16.msra.mxu0 0
  %847 = vmatprep.subr.bf16.mxu0 0
  %848 = vmatpush1.bf16.msra.mxu0 0
  %849 = vmatprep.subr.bf16.mxu0 0
  %850 = vmatpush1.bf16.msra.mxu0 0
  %851 = vmatprep.subr.bf16.mxu0 0
  %852 = vmatpush1.bf16.msra.mxu0 0
  %853 = vmatprep.subr.bf16.mxu0 0
  %854 = vmatpush1.bf16.msra.mxu0 0
  %855 = vmatprep.subr.bf16.mxu0 0
  %856 = vmatpush1.bf16.msra.mxu0 0
  %857 = vmatprep.subr.bf16.mxu0 0
  %858 = vmatpush1.bf16.msra.mxu0 0
  %859 = vmatprep.subr.bf16.mxu0 0
  %860 = vmatpush1.bf16.msra.mxu0 0
  %861 = vmatprep.subr.bf16.mxu0 0
  %862 = vmatpush1.bf16.msra.mxu0 0
  %863 = vmatprep.subr.bf16.mxu0 0
  %864 = vmatpush1.bf16.msra.mxu0 0
  %865 = vmatprep.subr.bf16.mxu0 0
  %866 = vmatpush1.bf16.msra.mxu0 0
  %867 = vmatprep.subr.bf16.mxu0 0
  %868 = vmatpush1.bf16.msra.mxu0 0
  %869 = vmatprep.mubr.bf16.mxu0 0
  %870 = vmatmul.mubr.bf16.gmra.mrb[0].mxu0 %v835
  %v871 = vpop.f32.mrb[0].mxu0
  %v872 = vadd.f32 0.0, %v871
  %v873 = vpop.f32.mrb[0].mxu0
  %v874 = vadd.f32 0.0, %v873
  %v875 = vpop.f32.mrb[0].mxu0
  %v876 = vpop.f32.mrb[0].mxu0
  %877 = vdwg.mxu0
  %v882 = vunpack.c.l.b16 %v805
  %v883 = vunpack.c.h.b16 %v805
  %v884 = vunpack.c.l.b16 %v806
  %v885 = vunpack.c.h.b16 %v806
  %v886 = vunpack.c.l.b16 %v807
  %v887 = vunpack.c.h.b16 %v807
  %v888 = vunpack.c.l.b16 %v808
  %v889 = vunpack.c.h.b16 %v808
  %v890 = vpack.c.b16 %v884, %v882
  %v891 = vpack.c.b16 %v885, %v883
  %v892 = vpack.c.b16 %v888, %v886
  %v893 = vpack.c.b16 %v889, %v887
  %v899 = vsel %vm760, %v804, 0
  %901 = vmatprep.subr.bf16.mxu0 %v891
  %902 = vmatpush1.bf16.msra.mxu0 %v890
  %903 = vmatprep.subr.bf16.mxu0 %v893
  %904 = vmatpush1.bf16.msra.mxu0 %v892
  %905 = vmatprep.subr.bf16.mxu0 0
  %906 = vmatpush1.bf16.msra.mxu0 0
  %907 = vmatprep.subr.bf16.mxu0 0
  %908 = vmatpush1.bf16.msra.mxu0 0
  %909 = vmatprep.subr.bf16.mxu0 0
  %910 = vmatpush1.bf16.msra.mxu0 0
  %911 = vmatprep.subr.bf16.mxu0 0
  %912 = vmatpush1.bf16.msra.mxu0 0
  %913 = vmatprep.subr.bf16.mxu0 0
  %914 = vmatpush1.bf16.msra.mxu0 0
  %915 = vmatprep.subr.bf16.mxu0 0
  %916 = vmatpush1.bf16.msra.mxu0 0
  %917 = vmatprep.subr.bf16.mxu0 0
  %918 = vmatpush1.bf16.msra.mxu0 0
  %919 = vmatprep.subr.bf16.mxu0 0
  %920 = vmatpush1.bf16.msra.mxu0 0
  %921 = vmatprep.subr.bf16.mxu0 0
  %922 = vmatpush1.bf16.msra.mxu0 0
  %923 = vmatprep.subr.bf16.mxu0 0
  %924 = vmatpush1.bf16.msra.mxu0 0
  %925 = vmatprep.subr.bf16.mxu0 0
  %926 = vmatpush1.bf16.msra.mxu0 0
  %927 = vmatprep.subr.bf16.mxu0 0
  %928 = vmatpush1.bf16.msra.mxu0 0
  %929 = vmatprep.subr.bf16.mxu0 0
  %930 = vmatpush1.bf16.msra.mxu0 0
  %931 = vmatprep.subr.bf16.mxu0 0
  %932 = vmatpush1.bf16.msra.mxu0 0
  %933 = vmatprep.mubr.bf16.mxu0 0
  %934 = vmatmul.mubr.bf16.gmra.mrb[0].mxu0 %v899
  %v935 = vpop.f32.mrb[0].mxu0
  %v936 = vadd.f32 %v872, %v935
  %v937 = vpop.f32.mrb[0].mxu0
  %v938 = vadd.f32 %v874, %v937
  %v939 = vpop.f32.mrb[0].mxu0
  %v940 = vpop.f32.mrb[0].mxu0
  %941 = vdwg.mxu0
  %v942 = vld [vmem:[%s6] sm:$0xff]
  %v943 = vld [vmem:[%s6 + $0x8] sm:$0xff]
  %v944 = vadd.f32 %v936, %v942
  %v945 = vadd.f32 %v938, %v943
  %v946 = vadd.f32 %v944, %v945
  %947 = vadd.xlane.f32.xlu0 %v946
  %v948 = vpop.xlane.xlu0 %947
  %v949 = vrcp.pop 256.0
  %v950 = vmul.f32 %v948, %v949
  %v951 = vsub.f32 %v944, %v950
  %v952 = vsub.f32 %v945, %v950
  %v953 = vmul.f32 %v951, %v951
  %v954 = vmul.f32 %v952, %v952
  %v955 = vadd.f32 %v953, %v954
  %956 = vadd.xlane.f32.xlu0 %v955
  %v957 = vpop.xlane.xlu0 %956
  %v958 = vmul.f32 %v957, %v949
  %v959 = vadd.f32 %v958, 1e-05
  %v960 = vrsqrt.pop %v959
  %v961 = vmul.f32 %v951, %v960
  %v962 = vmul.f32 %v952, %v960
  %v963 = vld [vmem:[%s7] sm:$0xff]
  %v964 = vld [vmem:[%s7 + $0x8] sm:$0xff]
  %v965 = vmul.f32 %v961, %v963
  %v966 = vmul.f32 %v962, %v964
  %v967 = vld [vmem:[%s8] sm:$0xff]
  %v968 = vld [vmem:[%s8 + $0x8] sm:$0xff]
  %v969 = vadd.f32 %v965, %v967
  %v970 = vadd.f32 %v966, %v968
  %v971 = vmul.f32 %v969, %v969
  %v972 = vmul.f32 %v970, %v970
  %v973 = vmul.f32 %v969, %v971
  %v974 = vmul.f32 %v970, %v972
  %v975 = vmul.f32 %v973, 0.044715
  %v976 = vmul.f32 %v974, 0.044715
  %v977 = vadd.f32 %v969, %v975
  %v978 = vadd.f32 %v970, %v976
  %v979 = vmul.f32 %v977, 0.7978846
  %v980 = vmul.f32 %v978, 0.7978846
  %v981 = vtanh.pop %v979
  %v982 = vtanh.pop %v980
  %v983 = vadd.f32 %v981, 1.0
  %v984 = vadd.f32 %v982, 1.0
  %v985 = vmul.f32 %v983, 0.5
  %v986 = vmul.f32 %v984, 0.5
  %v987 = vmul.f32 %v969, %v985
  %v988 = vmul.f32 %v970, %v986
  %v989 = vpack.c.bf16 %v987, %v987
  %v990 = vpack.c.bf16 %v988, %v988
  %v991 = vld [vmem:[%s9] sm:$0xf]
  %v992 = vld [vmem:[%s9 + $0x4] sm:$0xf]
  %v993 = vld [vmem:[%s9 + $0x8] sm:$0xf]
  %v994 = vld [vmem:[%s9 + $0xc] sm:$0xf]
  %v995 = vld [vmem:[%s9 + $0x10] sm:$0xf]
  %v996 = vld [vmem:[%s9 + $0x14] sm:$0xf]
  %v997 = vld [vmem:[%s9 + $0x18] sm:$0xf]
  %v998 = vld [vmem:[%s9 + $0x1c] sm:$0xf]
  %v999 = vld [vmem:[%s9 + $0x20] sm:$0xf]
  %v1000 = vld [vmem:[%s9 + $0x24] sm:$0xf]
  %v1001 = vld [vmem:[%s9 + $0x28] sm:$0xf]
  %v1002 = vld [vmem:[%s9 + $0x2c] sm:$0xf]
  %v1003 = vld [vmem:[%s9 + $0x30] sm:$0xf]
  %v1004 = vld [vmem:[%s9 + $0x34] sm:$0xf]
  %v1005 = vld [vmem:[%s9 + $0x38] sm:$0xf]
  %v1006 = vld [vmem:[%s9 + $0x3c] sm:$0xf]
  %v1007 = vld [vmem:[%s9 + $0x40] sm:$0xf]
  %v1008 = vld [vmem:[%s9 + $0x44] sm:$0xf]
  %v1009 = vld [vmem:[%s9 + $0x48] sm:$0xf]
  %v1010 = vld [vmem:[%s9 + $0x4c] sm:$0xf]
  %v1011 = vld [vmem:[%s9 + $0x50] sm:$0xf]
  %v1012 = vld [vmem:[%s9 + $0x54] sm:$0xf]
  %v1013 = vld [vmem:[%s9 + $0x58] sm:$0xf]
  %v1014 = vld [vmem:[%s9 + $0x5c] sm:$0xf]
  %v1015 = vld [vmem:[%s9 + $0x60] sm:$0xf]
  %v1016 = vld [vmem:[%s9 + $0x64] sm:$0xf]
  %v1017 = vld [vmem:[%s9 + $0x68] sm:$0xf]
  %v1018 = vld [vmem:[%s9 + $0x6c] sm:$0xf]
  %v1019 = vld [vmem:[%s9 + $0x70] sm:$0xf]
  %v1020 = vld [vmem:[%s9 + $0x74] sm:$0xf]
  %v1021 = vld [vmem:[%s9 + $0x78] sm:$0xf]
  %v1022 = vld [vmem:[%s9 + $0x7c] sm:$0xf]
  %v1023 = vld [vmem:[%s10] sm:$0xff]
  %v1056 = vunpack.c.l.b16 %v991
  %v1057 = vunpack.c.l.b16 %v992
  %v1058 = vunpack.c.l.b16 %v993
  %v1059 = vunpack.c.l.b16 %v994
  %v1060 = vunpack.c.l.b16 %v995
  %v1061 = vunpack.c.l.b16 %v996
  %v1062 = vunpack.c.l.b16 %v997
  %v1063 = vunpack.c.l.b16 %v998
  %v1064 = vunpack.c.l.b16 %v999
  %v1065 = vunpack.c.l.b16 %v1000
  %v1066 = vunpack.c.l.b16 %v1001
  %v1067 = vunpack.c.l.b16 %v1002
  %v1068 = vunpack.c.l.b16 %v1003
  %v1069 = vunpack.c.l.b16 %v1004
  %v1070 = vunpack.c.l.b16 %v1005
  %v1071 = vunpack.c.l.b16 %v1006
  %v1072 = vunpack.c.l.b16 %v1007
  %v1073 = vunpack.c.l.b16 %v1008
  %v1074 = vunpack.c.l.b16 %v1009
  %v1075 = vunpack.c.l.b16 %v1010
  %v1076 = vunpack.c.l.b16 %v1011
  %v1077 = vunpack.c.l.b16 %v1012
  %v1078 = vunpack.c.l.b16 %v1013
  %v1079 = vunpack.c.l.b16 %v1014
  %v1080 = vunpack.c.l.b16 %v1015
  %v1081 = vunpack.c.l.b16 %v1016
  %v1082 = vunpack.c.l.b16 %v1017
  %v1083 = vunpack.c.l.b16 %v1018
  %v1084 = vunpack.c.l.b16 %v1019
  %v1085 = vunpack.c.l.b16 %v1020
  %v1086 = vunpack.c.l.b16 %v1021
  %v1087 = vunpack.c.l.b16 %v1022
  %v1088 = vpack.c.b16 %v1057, %v1056
  %v1089 = vpack.c.b16 %v1059, %v1058
  %v1090 = vpack.c.b16 %v1061, %v1060
  %v1091 = vpack.c.b16 %v1063, %v1062
  %v1092 = vpack.c.b16 %v1065, %v1064
  %v1093 = vpack.c.b16 %v1067, %v1066
  %v1094 = vpack.c.b16 %v1069, %v1068
  %v1095 = vpack.c.b16 %v1071, %v1070
  %v1096 = vpack.c.b16 %v1073, %v1072
  %v1097 = vpack.c.b16 %v1075, %v1074
  %v1098 = vpack.c.b16 %v1077, %v1076
  %v1099 = vpack.c.b16 %v1079, %v1078
  %v1100 = vpack.c.b16 %v1081, %v1080
  %v1101 = vpack.c.b16 %v1083, %v1082
  %v1102 = vpack.c.b16 %v1085, %v1084
  %v1103 = vpack.c.b16 %v1087, %v1086
  %1120 = vmatprep.subr.bf16.mxu0 0
  %1121 = vmatpush1.bf16.msra.mxu0 %v1088
  %1122 = vmatprep.subr.bf16.mxu0 0
  %1123 = vmatpush1.bf16.msra.mxu0 %v1089
  %1124 = vmatprep.subr.bf16.mxu0 0
  %1125 = vmatpush1.bf16.msra.mxu0 %v1090
  %1126 = vmatprep.subr.bf16.mxu0 0
  %1127 = vmatpush1.bf16.msra.mxu0 %v1091
  %1128 = vmatprep.subr.bf16.mxu0 0
  %1129 = vmatpush1.bf16.msra.mxu0 %v1092
  %1130 = vmatprep.subr.bf16.mxu0 0
  %1131 = vmatpush1.bf16.msra.mxu0 %v1093
  %1132 = vmatprep.subr.bf16.mxu0 0
  %1133 = vmatpush1.bf16.msra.mxu0 %v1094
  %1134 = vmatprep.subr.bf16.mxu0 0
  %1135 = vmatpush1.bf16.msra.mxu0 %v1095
  %1136 = vmatprep.subr.bf16.mxu0 0
  %1137 = vmatpush1.bf16.msra.mxu0 %v1096
  %1138 = vmatprep.subr.bf16.mxu0 0
  %1139 = vmatpush1.bf16.msra.mxu0 %v1097
  %1140 = vmatprep.subr.bf16.mxu0 0
  %1141 = vmatpush1.bf16.msra.mxu0 %v1098
  %1142 = vmatprep.subr.bf16.mxu0 0
  %1143 = vmatpush1.bf16.msra.mxu0 %v1099
  %1144 = vmatprep.subr.bf16.mxu0 0
  %1145 = vmatpush1.bf16.msra.mxu0 %v1100
  %1146 = vmatprep.subr.bf16.mxu0 0
  %1147 = vmatpush1.bf16.msra.mxu0 %v1101
  %1148 = vmatprep.subr.bf16.mxu0 0
  %1149 = vmatpush1.bf16.msra.mxu0 %v1102
  %1150 = vmatprep.subr.bf16.mxu0 0
  %1151 = vmatpush1.bf16.msra.mxu0 %v1103
  %1152 = vmatprep.mubr.bf16.mxu0 %v990
  %1153 = vmatmul.mubr.bf16.gmra.mrb[0].mxu0 %v989
  %v1154 = vpop.f32.mrb[0].mxu0
  %v1155 = vadd.f32 %v1023, %v1154
  %v1156 = vpop.f32.mrb[0].mxu0
  %v1157 = vpop.f32.mrb[0].mxu0
  %v1158 = vpop.f32.mrb[0].mxu0
  %1159 = vdwg.mxu0
  %1160 = vst [vmem:[%s11] sm:$0xff] %v1155
  // Predicated region
  $region46: #{sentiment_clip_forward.1} parent=0 // pred_check
    _
  $region47: #{sentiment_clip_forward.1} parent=0 // pred_check_branch
    %1162 = sbr.rel (0) target = $region49
  $region48: #{sentiment_clip_forward.1} parent=0 // pred_region
    _
  $region49: #{sentiment_clip_forward.1} parent=0 // pred_fallthru
    _
  // Predicated region
  $region50: #{sentiment_clip_forward.1} parent=0 // pred_check
    _
  $region51: #{sentiment_clip_forward.1} parent=0 // pred_check_branch
    %1164 = sbr.rel (0) target = $region53
  $region52: #{sentiment_clip_forward.1} parent=0 // pred_region
    _
  $region53: #{sentiment_clip_forward.1} parent=0 // pred_fallthru
    _

</llo_original>
